<compile_context>
chip_gen: v6e
topology: v6e:2x2x1
jax: 0.10.0
libtpu: 0.0.40
codegen_flags: <defaults>
</compile_context>

<pallas_src>
import functools

import jax
import jax.numpy as jnp
from jax.experimental import pallas as pl
from jax.experimental.pallas import tpu as pltpu


# ----------------------------------------------------------------------------
# helpers
# ----------------------------------------------------------------------------
def _dot_nt(a, b):
    """a [M, D] contracted with b [N, D] along D -> [M, N] (i.e. a @ b.T)."""
    return jax.lax.dot_general(
        a, b, (((1,), (1,)), ((), ())), preferred_element_type=jnp.float32
    )


# ----------------------------------------------------------------------------
# standalone matmul kernel (used to build `output` = prototypes(embedding))
# ----------------------------------------------------------------------------
def _matmul_nt_kernel(a_ref, b_ref, o_ref):
    o_ref[...] = _dot_nt(a_ref[...], b_ref[...])


def pallas_matmul_nt(a, b):
    """a [M, D] @ b[N, D].T -> [M, N]."""
    M = a.shape[0]
    N = b.shape[0]
    return pl.pallas_call(
        _matmul_nt_kernel,
        out_shape=jax.ShapeDtypeStruct((M, N), jnp.float32),
        in_specs=[pl.BlockSpec(memory_space=pltpu.MemorySpace.VMEM)] * 2,
        out_specs=pl.BlockSpec(memory_space=pltpu.MemorySpace.VMEM),
    )(a, b)


# ----------------------------------------------------------------------------
# fused per-crop kernel: queue-matmul + concat + sinkhorn (+ cc terms)
# ----------------------------------------------------------------------------
def _crop_kernel(*refs, epsilon, world_size, n_iters, temperature, bs,
                 with_queue, compute_cc):
    it = iter(refs)
    queue_ref = next(it) if with_queue else None
    w_ref = next(it) if with_queue else None
    out_ref = next(it)
    x_ref = next(it) if compute_cc else None
    q_ref = next(it)
    cc_ref = next(it) if compute_cc else None
    scores_ref = next(it) if with_queue else None        # VMEM scratch [QLEN+bs, K]

    if with_queue:
        qlen = queue_ref.shape[0]
        # queue @ W.T stays resident in VMEM; "concat" is two stores into scratch.
        scores_ref[0:qlen, :] = _dot_nt(queue_ref[...], w_ref[...])
        scores_ref[qlen:qlen + bs, :] = out_ref[...]
        scores = scores_ref[...]
    else:
        scores = out_ref[...]

    # --- distributed_sinkhorn, in the [N, K] (= Q^T) layout --------------------
    n, k = scores.shape
    b = float(n * world_size)
    qm = jnp.exp(scores * (1.0 / epsilon))
    tot = jnp.sum(jnp.sum(qm, axis=1, keepdims=True), axis=0, keepdims=True)
    qm = qm * pl.reciprocal(tot)                          # Q /= sum_Q
    inv_k = 1.0 / k
    inv_b = 1.0 / b
    for _ in range(n_iters):
        col = jnp.sum(qm, axis=0, keepdims=True)          # Q row sums -> [1, K]
        qm = qm * (pl.reciprocal(col, approx=True) * inv_k)
        row = jnp.sum(qm, axis=1, keepdims=True)          # Q col sums -> [N, 1]
        qm = qm * (pl.reciprocal(row, approx=True) * inv_b)
    qm = qm * b

    q = qm[n - bs:n, :]                                   # last bs rows
    q_ref[...] = q

    if compute_cc:
        # all views stacked into one [(V*bs), K] slab; log_softmax is row-wise.
        x = x_ref[...] * (1.0 / temperature)
        m = jnp.max(x, axis=1, keepdims=True)
        lse = m + jnp.log(jnp.sum(jnp.exp(x - m), axis=1, keepdims=True))
        logp = x - lse
        n_views = x_ref.shape[0] // bs
        total = jnp.zeros((1, 1), jnp.float32)
        for v in range(n_views):
            per = jnp.sum(q * logp[v * bs:(v + 1) * bs, :], axis=1, keepdims=True)
            total = total + jnp.sum(per, axis=0, keepdims=True)
        cc_ref[...] = -total * (1.0 / bs)                 # sum over views of per-view means


def pallas_crop(out_crop, x_views, queue_i, prototypes_w, *, epsilon, world_size,
                n_iters, temperature, with_queue, compute_cc):
    bs, K = out_crop.shape
    inputs = []
    scratch = []
    if with_queue:
        inputs += [queue_i, prototypes_w]
        scratch.append(pltpu.VMEM((queue_i.shape[0] + bs, K), jnp.float32))
    inputs.append(out_crop)
    if compute_cc:
        inputs.append(x_views)
        out_shape = (jax.ShapeDtypeStruct((bs, K), jnp.float32),
                     jax.ShapeDtypeStruct((1, 1), jnp.float32))
        out_specs = (pl.BlockSpec(memory_space=pltpu.MemorySpace.VMEM),
                     pl.BlockSpec(memory_space=pltpu.MemorySpace.VMEM))
    else:
        out_shape = jax.ShapeDtypeStruct((bs, K), jnp.float32)
        out_specs = pl.BlockSpec(memory_space=pltpu.MemorySpace.VMEM)

    kern = functools.partial(
        _crop_kernel, epsilon=epsilon, world_size=world_size, n_iters=n_iters,
        temperature=temperature, bs=bs, with_queue=with_queue,
        compute_cc=compute_cc)
    res = pl.pallas_call(
        kern,
        out_shape=out_shape,
        in_specs=[pl.BlockSpec(memory_space=pltpu.MemorySpace.VMEM)] * len(inputs),
        out_specs=out_specs,
        scratch_shapes=tuple(scratch),
    )(*inputs)
    if compute_cc:
        q, cc = res
        return q, cc[0, 0]
    return res, None


# ----------------------------------------------------------------------------
# fused contrastive kernel (masks built in-kernel, s21 matmul elided)
# ----------------------------------------------------------------------------
def _contrast_kernel(x_ref, xa_ref, h1r_ref, h2r_ref, h1c_ref, neg1_ref, neg2_ref,
                     neg2t_ref, o_ref, *, temperature, hard_selection):
    x = x_ref[...]
    xa = xa_ref[...]
    inv_t = 1.0 / temperature
    # F.normalize via rsqrt (EUP); clamp matches torch eps=1e-12 on the norm.
    o1 = x * jax.lax.rsqrt(jnp.maximum(jnp.sum(x * x, axis=1, keepdims=True), 1e-24))
    o2 = xa * jax.lax.rsqrt(jnp.maximum(jnp.sum(xa * xa, axis=1, keepdims=True), 1e-24))

    s11 = jnp.exp(_dot_nt(o1, o1) * inv_t)
    s12 = jnp.exp(_dot_nt(o1, o2) * inv_t)
    s22 = jnp.exp(_dot_nt(o2, o2) * inv_t)
    # s21 never computed: sum(s21 * m21) == sum(s12 * m21^T).

    bs = x.shape[0]
    rid = jax.lax.broadcasted_iota(jnp.int32, (bs, bs), 0)
    cid = jax.lax.broadcasted_iota(jnp.int32, (bs, bs), 1)
    off_diag = rid != cid
    on_diag = rid == cid

    if hard_selection:
        h1r = h1r_ref[...]                    # [1, bs]   hard_q of crop 0
        h2r = h2r_ref[...]                    # [1, bs]   hard_q of crop 1
        h1c = h1c_ref[...]                    # [bs, 1]   hard_q of crop 0 (column)
        neg1 = neg1_ref[...]                  # [bs, n_neg]
        neg2 = neg2_ref[...]                  # [bs, n_neg]
        neg2t = neg2t_ref[...]                # [n_neg, bs]
        n_neg = neg1.shape[1]
        m11 = neg1[:, 0:1] == h1r             # [i,j] = hard1[j] in neg1[i]
        m12 = neg1[:, 0:1] == h2r             # [i,j] = hard2[j] in neg1[i]
        m21t = h1c == neg2t[0:1, :]           # [i,j] = hard1[i] in neg2[j]  (= m21^T)
        m22 = neg2[:, 0:1] == h2r             # [i,j] = hard2[j] in neg2[i]
        for j in range(1, n_neg):
            m11 = m11 | (neg1[:, j:j + 1] == h1r)
            m12 = m12 | (neg1[:, j:j + 1] == h2r)
            m21t = m21t | (h1c == neg2t[j:j + 1, :])
            m22 = m22 | (neg2[:, j:j + 1] == h2r)
        m11 = m11 & off_diag
        m22 = m22 & off_diag
        denom = (jnp.sum(jnp.where(m11, s11, 0.0))
                 + jnp.sum(jnp.where(m12, s12, 0.0))
                 + jnp.sum(jnp.where(m21t, s12, 0.0))
                 + jnp.sum(jnp.where(m22, s22, 0.0)))
    else:
        denom = (jnp.sum(jnp.where(off_diag, s11, 0.0))
                 + 2.0 * jnp.sum(s12)
                 + jnp.sum(jnp.where(off_diag, s22, 0.0)))

    # positives = diag(s12) = exp(sum(o1*o2, -1)/T); torch's cat([pos,pos]).mean()
    # over 2bs equals the mean over bs of the same values.
    pos = jnp.sum(jnp.where(on_diag, s12, 0.0), axis=1, keepdims=True)  # [bs, 1]
    losses = -jnp.log(pos / denom)
    o_ref[...] = jnp.mean(losses, axis=0, keepdims=True)


def pallas_contrast(x, x_aug, hard1_row, hard2_row, hard1_col, neg1, neg2, neg2t,
                    *, temperature, hard_selection):
    kern = functools.partial(_contrast_kernel, temperature=temperature,
                             hard_selection=hard_selection)
    out = pl.pallas_call(
        kern,
        out_shape=jax.ShapeDtypeStruct((1, 1), jnp.float32),
        in_specs=[pl.BlockSpec(memory_space=pltpu.MemorySpace.VMEM)] * 8,
        out_specs=pl.BlockSpec(memory_space=pltpu.MemorySpace.VMEM),
    )(x, x_aug, hard1_row, hard2_row, hard1_col, neg1, neg2, neg2t)
    return out[0, 0]


# ----------------------------------------------------------------------------
# Module (forward only)
# ----------------------------------------------------------------------------
class ClusteringConsistency:
    def __init__(self, use_queue=True, epsilon=0.05, world_size=1,
                 sinkhorn_iterations=3, temperature=0.2,
                 hard_selection=True, sample_reweighting=False):
        self.use_queue = use_queue
        self.epsilon = epsilon
        self.world_size = world_size
        self.sinkhorn_iterations = sinkhorn_iterations
        self.temperature = temperature
        self.hard_selection = hard_selection
        self.sample_reweighting = sample_reweighting

    def clustering_consistency_loss(self, crops_for_assign, nmb_crops, queue, bs,
                                    prototypes_w, output, embedding):
        total_crops = int(sum(nmb_crops))
        hard_q, neg_q, z = [], [], []
        cc_loss = jnp.float32(0.0)
        last = len(crops_for_assign) - 1
        for i, crop_id in enumerate(crops_for_assign):
            out = jax.lax.stop_gradient(output[bs * crop_id:bs * (crop_id + 1)])
            with_queue = False
            queue_i = None
            if queue is not None:
                if not self.use_queue:
                    # Host-side (static) decision; avoids forcing a traced value
                    # into Python control flow.
                    # TODO(synk): hoist this check out of the traced function if
                    # the module is ever wrapped in jax.jit with use_queue=False.
                    self.use_queue = bool(
                        jax.device_get(jnp.any(queue[i, -1, :] != 0)))
                if self.use_queue:
                    with_queue = True
                    queue_i = queue[i]
                # TODO(synk): PyTorch mutates `queue` in place here (FIFO update
                # with `embedding`); side effect only, does not change the loss.
            views = [c for c in range(total_crops) if c != crop_id]
            for v in views:
                z.append(embedding[bs * v:bs * (v + 1), :] / self.temperature)
            # cc_loss is reset at the top of every crop iteration in the
            # reference, so only the LAST crop's terms survive: skip the dead
            # cc work for earlier crops.
            compute_cc = (i == last) and len(views) > 0
            x_views = None
            if compute_cc:
                x_views = jnp.concatenate(
                    [output[bs * v:bs * (v + 1)] for v in views], axis=0)
            q, cc = pallas_crop(
                out, x_views, queue_i, prototypes_w,
                epsilon=self.epsilon, world_size=self.world_size,
                n_iters=self.sinkhorn_iterations, temperature=self.temperature,
                with_queue=with_queue, compute_cc=compute_cc)
            hard_q.append(jnp.argmax(q, axis=1))
            neg_q.append(jnp.argsort(q, axis=1)[:, 2:8])
            if compute_cc:
                cc_loss = cc
        return cc_loss, z, hard_q, neg_q

    def contrast_loss(self, x, x_aug, hard_q, neg_q, prototypes_w):
        if self.sample_reweighting:
            # TODO(synk): sample_reweighting branch (prototype cosine-distance
            # reweighting) not implemented; default configuration disables it.
            raise NotImplementedError("sample_reweighting not supported")
        bs = x.shape[0]
        hard1 = hard_q[0].astype(jnp.int32)
        hard2 = hard_q[1].astype(jnp.int32)
        neg1 = neg_q[0].astype(jnp.int32)
        neg2 = neg_q[1].astype(jnp.int32)
        return pallas_contrast(
            x, x_aug,
            hard1.reshape(1, bs), hard2.reshape(1, bs), hard1.reshape(bs, 1),
            neg1, neg2, neg2.T,
            temperature=self.temperature, hard_selection=self.hard_selection)

    def __call__(self, bs, crops_for_assign, nmb_crops, queue, prototypes_w,
                 output, embedding):
        subloss, z, hard_q, neg_q = self.clustering_consistency_loss(
            crops_for_assign=crops_for_assign, nmb_crops=nmb_crops, queue=queue,
            bs=bs, prototypes_w=prototypes_w, output=output, embedding=embedding)
        contrast = self.contrast_loss(z[0], z[1], hard_q, neg_q, prototypes_w)
        loss = contrast + 6.0 * subloss / (int(sum(nmb_crops)) - 1)
        return loss


# ----------------------------------------------------------------------------
# Driver
# ----------------------------------------------------------------------------
if __name__ == "__main__":
    bs = 8          # batch per crop
    D = 32          # embedding dim
    K = 16          # number of prototypes
    QLEN = 16       # queue length per assign-crop
    crops_for_assign = [0, 1]
    nmb_crops = [2]
    n_crops = int(sum(nmb_crops))

    def l2n(v):
        return v / jnp.linalg.norm(v, axis=-1, keepdims=True)

    key = jax.random.PRNGKey(0)
    k1, k2, k3 = jax.random.split(key, 3)
    # SwAV uses L2-normalised embeddings / prototypes; do the same so exp(out/eps)
    # stays in f32 range.
    embedding = l2n(jax.random.normal(k1, (n_crops * bs, D), jnp.float32))
    prototypes_w = l2n(jax.random.normal(k2, (K, D), jnp.float32))      # [K, D]
    queue = l2n(jax.random.normal(k3, (len(crops_for_assign), QLEN, D), jnp.float32))

    # output = prototypes(embedding) = embedding @ W^T  (Pallas MXU matmul)
    output = pallas_matmul_nt(embedding, prototypes_w)                  # [n_crops*bs, K]

    module = ClusteringConsistency(use_queue=True, epsilon=0.05, world_size=1,
                                   sinkhorn_iterations=3, temperature=0.2,
                                   hard_selection=True, sample_reweighting=False)
    loss = module(bs, crops_for_assign, nmb_crops, queue, prototypes_w,
                  output, embedding)
    jax.block_until_ready(loss)
    print("KERNEL_OK")
</pallas_src>

<mosaic_0001>
module attributes {stable_mosaic.version = 11 : i64} {
  func.func @_matmul_nt_kernel(%arg0: memref<16x32xf32, #tpu.memory_space<vmem>>, %arg1: memref<16x32xf32, #tpu.memory_space<vmem>>, %arg2: memref<16x16xf32, #tpu.memory_space<vmem>>) attributes {dimension_semantics = [], scalar_prefetch = 0 : i64, scratch_operands = 0 : i64, tpu.core_type = #tpu.core_type<tc>} {
    %c0 = arith.constant 0 : index
    %c0_0 = arith.constant 0 : index
    %0 = vector.load %arg0[%c0, %c0_0] : memref<16x32xf32, #tpu.memory_space<vmem>>, vector<16x32xf32>
    %c0_1 = arith.constant 0 : index
    %c0_2 = arith.constant 0 : index
    %1 = vector.load %arg1[%c0_1, %c0_2] : memref<16x32xf32, #tpu.memory_space<vmem>>, vector<16x32xf32>
    %cst = arith.constant dense<0.000000e+00> : vector<16x16xf32>
    %2 = tpu.matmul %0, %1, %cst {dimension_numbers = #tpu.dot_dimension_numbers<[1], [1], [0], [0], [0, 0, 1, 0], [], []>} : vector<16x32xf32>, vector<16x32xf32>, vector<16x16xf32> -> vector<16x16xf32>
    %c0_3 = arith.constant 0 : index
    %c0_4 = arith.constant 0 : index
    %3 = vector.load %arg2[%c0_3, %c0_4] : memref<16x16xf32, #tpu.memory_space<vmem>>, vector<16x16xf32>
    tpu.vector_store %arg2[%c0_3, %c0_4], %2 {strides = array<i32>} : memref<16x16xf32, #tpu.memory_space<vmem>>, vector<16x16xf32>,
    return
  }
}

</mosaic_0001>

<llo_original>
// kernel: tpu_custom_call.1
$region0: #{tpu_custom_call.1}
  #allocation0 [shape = 'u32[]', space=smem, size = 0x4, offset = 0x4, fixed_abs, tag = 'smem constant byte address 0x4 - core index']
  #allocation1 [shape = 'u32[144,128]{1,0:T(1,128)}', space=vmem, size = 0x12000, scoped, tag = 'internal scratch']
  %s0 = inlined_call_operand.hbm [shape: f32[16,32], index: 0, kind: input, shape index: {}]
  %s1 = inlined_call_operand.hbm [shape: f32[16,32], index: 1, kind: input, shape index: {}]
  %s2 = inlined_call_operand.hbm [shape: f32[16,16], index: 2, kind: output, shape index: {}]
  %s3 = sld [smem:[#allocation0]]
  $region26: #{tpu_custom_call.1} parent=0
    _
  %s5 = ssub.s32 1, %s3
  %s6 = scalar_select 0, %s5, %s3
  $region1: #{tpu_custom_call.1} parent=0
    #allocation2 [shape = 'u8[8192]{0}', space=vmem, size = 0x2000, scoped, tag = 'input window, operand 0, single buffered']
    #allocation3 [shape = 's32[1]{0}', space=sflag, size = 0x4, scoped, tag = 'scoped memory for tpu_custom_call.1']
    #allocation4 [shape = 's32[1]{0}', space=sflag, size = 0x4, scoped, tag = 'scoped memory for tpu_custom_call.1']
    #allocation5 [shape = 'u8[8192]{0}', space=vmem, size = 0x2000, scoped, tag = 'input window, operand 1, single buffered']
    #allocation6 [shape = 's32[1]{0}', space=sflag, size = 0x4, scoped, tag = 'scoped memory for tpu_custom_call.1']
    #allocation7 [shape = 'u8[8192]{0}', space=vmem, size = 0x2000, scoped, tag = 'output window, operand 0, single buffered']
    %7 = vsyncpa [#allocation3], 0
    %8 = vsyncpa [#allocation6], 0
    %9 = vsyncpa [#allocation4], 0
    // Predicated region
    $region2: #{tpu_custom_call.1} parent=1 // pred_check
      _
    $region3: #{tpu_custom_call.1} parent=1 // pred_check_branch
      %11 = sbr.rel (0) target = $region5
    $region4: #{tpu_custom_call.1} parent=1 // pred_region
      %s13 = ssub.s32 256, 256
      %14 = vsyncadd [#allocation3], %s13
      %s15 = sshll.u32 [#allocation2], 4
      %s16 = int_to_ptr.vmem [resolvable:$true] %s15
      %21 = dma.hbm_to_vmem [thread:$0]  %s0, 256, %s16, [#allocation3], 128, 128, 8
    $region5: #{tpu_custom_call.1} parent=1 // pred_fallthru
      _
    // Predicated region
    $region6: #{tpu_custom_call.1} parent=1 // pred_check
      _
    $region7: #{tpu_custom_call.1} parent=1 // pred_check_branch
      %23 = sbr.rel (0) target = $region9
    $region8: #{tpu_custom_call.1} parent=1 // pred_region
      %s25 = ssub.s32 256, 256
      %26 = vsyncadd [#allocation6], %s25
      %s27 = sshll.u32 [#allocation5], 4
      %s28 = int_to_ptr.vmem [resolvable:$true] %s27
      %33 = dma.hbm_to_vmem [thread:$0]  %s1, 256, %s28, [#allocation6], 128, 128, 8
    $region9: #{tpu_custom_call.1} parent=1 // pred_fallthru
      _
    // Predicated region
    $region10: #{tpu_custom_call.1} parent=1 // pred_check
      _
    $region11: #{tpu_custom_call.1} parent=1 // pred_check_branch
      %35 = sbr.rel (0) target = $region13
    $region12: #{tpu_custom_call.1} parent=1 // pred_region
      %36 = dma.done [#allocation3], 256
    $region13: #{tpu_custom_call.1} parent=1 // pred_fallthru
      _
    // Predicated region
    $region14: #{tpu_custom_call.1} parent=1 // pred_check
      _
    $region15: #{tpu_custom_call.1} parent=1 // pred_check_branch
      %38 = sbr.rel (0) target = $region17
    $region16: #{tpu_custom_call.1} parent=1 // pred_region
      %39 = dma.done [#allocation6], 256
    $region17: #{tpu_custom_call.1} parent=1 // pred_fallthru
      _
    %v40 = vld [vmem:[#allocation2] sm:$0xff]
    %v41 = vld [vmem:[#allocation2 + $0x8] sm:$0xff]
    %v42 = vld [vmem:[#allocation5] sm:$0xff]
    %v43 = vld [vmem:[#allocation5 + $0x8] sm:$0xff]
    %vm44 = vcmask 261120
    %v46 = vsel %vm44, %v40, 0
    %v49 = vsel %vm44, %v41, 0
    %v52 = vsel %vm44, %v42, 0
    %v55 = vsel %vm44, %v43, 0
    %57 = vmatprep.subr.mxu0 0.0
    %58 = vmatpush1.xpose.msra.mxu0 0.0
    %59 = vmatprep.subr.mxu0 0.0
    %60 = vmatpush1.xpose.msra.mxu0 0.0
    %61 = vmatprep.subr.mxu0 0.0
    %62 = vmatpush1.xpose.msra.mxu0 0.0
    %63 = vmatprep.subr.mxu0 0.0
    %64 = vmatpush1.xpose.msra.mxu0 0.0
    %65 = vmatprep.subr.mxu0 0.0
    %66 = vmatpush1.xpose.msra.mxu0 0.0
    %67 = vmatprep.subr.mxu0 0.0
    %68 = vmatpush1.xpose.msra.mxu0 0.0
    %69 = vmatprep.subr.mxu0 0.0
    %70 = vmatpush1.xpose.msra.mxu0 0.0
    %71 = vmatprep.subr.mxu0 0.0
    %72 = vmatpush1.xpose.msra.mxu0 0.0
    %73 = vmatprep.subr.mxu0 0.0
    %74 = vmatpush1.xpose.msra.mxu0 0.0
    %75 = vmatprep.subr.mxu0 0.0
    %76 = vmatpush1.xpose.msra.mxu0 0.0
    %77 = vmatprep.subr.mxu0 0.0
    %78 = vmatpush1.xpose.msra.mxu0 0.0
    %79 = vmatprep.subr.mxu0 0.0
    %80 = vmatpush1.xpose.msra.mxu0 0.0
    %81 = vmatprep.subr.mxu0 0.0
    %82 = vmatpush1.xpose.msra.mxu0 0.0
    %83 = vmatprep.subr.mxu0 0.0
    %84 = vmatpush1.xpose.msra.mxu0 0.0
    %85 = vmatprep.subr.mxu0 0.0
    %86 = vmatpush1.xpose.msra.mxu0 %v55
    %87 = vmatprep.subr.mxu0 0.0
    %88 = vmatpush1.xpose.msra.mxu0 %v52
    %89 = vmatprep.subr.mxu0 0.0
    %90 = vmatpush2.xpose.msra.mxu0 0.0
    %91 = vmatprep.subr.mxu0 0.0
    %92 = vmatpush2.xpose.msra.mxu0 0.0
    %93 = vmatprep.subr.mxu0 0.0
    %94 = vmatpush2.xpose.msra.mxu0 0.0
    %95 = vmatprep.subr.mxu0 0.0
    %96 = vmatpush2.xpose.msra.mxu0 0.0
    %97 = vmatprep.subr.mxu0 0.0
    %98 = vmatpush2.xpose.msra.mxu0 0.0
    %99 = vmatprep.subr.mxu0 0.0
    %100 = vmatpush2.xpose.msra.mxu0 0.0
    %101 = vmatprep.subr.mxu0 0.0
    %102 = vmatpush2.xpose.msra.mxu0 0.0
    %103 = vmatprep.subr.mxu0 0.0
    %104 = vmatpush2.xpose.msra.mxu0 0.0
    %105 = vmatprep.subr.mxu0 0.0
    %106 = vmatpush2.xpose.msra.mxu0 0.0
    %107 = vmatprep.subr.mxu0 0.0
    %108 = vmatpush2.xpose.msra.mxu0 0.0
    %109 = vmatprep.subr.mxu0 0.0
    %110 = vmatpush2.xpose.msra.mxu0 0.0
    %111 = vmatprep.subr.mxu0 0.0
    %112 = vmatpush2.xpose.msra.mxu0 0.0
    %113 = vmatprep.subr.mxu0 0.0
    %114 = vmatpush2.xpose.msra.mxu0 0.0
    %115 = vmatprep.subr.mxu0 0.0
    %116 = vmatpush2.xpose.msra.mxu0 0.0
    %117 = vmatprep.subr.mxu0 0.0
    %118 = vmatpush2.xpose.msra.mxu0 0.0
    %119 = vmatprep.subr.mxu0 0.0
    %120 = vmatpush2.xpose.msra.mxu0 0.0
    %121 = vmatprep.mubr.f32.mxu0 0.0
    %122 = vmatmul.mubr.f32.gmra.mxu0 %v46
    %v123 = vpop.f32.mrf.mxu0
    %v124 = vadd.f32 0.0, %v123
    %v125 = vpop.f32.mrf.mxu0
    %126 = vmatprep.mubr.f32.mxu0 0.0
    %127 = vmatmul.mubr.f32.gmra.mxu0 %v49
    %v128 = vpop.f32.mrf.mxu0
    %v129 = vadd.f32 0.0, %v128
    %v130 = vpop.f32.mrf.mxu0
    %131 = vdwg.mxu0
    %vm132 = vcmask 130048
    %133 = vst.msk [vmem:[#allocation7] sm:$0xff] %vm132, %v124
    %134 = vst.msk [vmem:[#allocation7 + $0x8] sm:$0xff] %vm132, %v129
    // Predicated region
    $region18: #{tpu_custom_call.1} parent=1 // pred_check
      _
    $region19: #{tpu_custom_call.1} parent=1 // pred_check_branch
      %136 = sbr.rel (0) target = $region21
    $region20: #{tpu_custom_call.1} parent=1 // pred_region
      %s138 = ssub.s32 256, 256
      %139 = vsyncadd [#allocation4], %s138
      %s140 = sshll.u32 [#allocation7], 4
      %s141 = int_to_ptr.vmem [resolvable:$true] %s140
      %146 = dma.vmem_to_hbm [thread:$0]  %s141, 256, %s2, [#allocation4], 128, 128, 8
    $region21: #{tpu_custom_call.1} parent=1 // pred_fallthru
      _
    // Predicated region
    $region22: #{tpu_custom_call.1} parent=1 // pred_check
      _
    $region23: #{tpu_custom_call.1} parent=1 // pred_check_branch
      %148 = sbr.rel (0) target = $region25
    $region24: #{tpu_custom_call.1} parent=1 // pred_region
      %149 = dma.done [#allocation4], 256
    $region25: #{tpu_custom_call.1} parent=1 // pred_fallthru
      _
    %150 = vsyncpa [#allocation3], 1
    %151 = vsyncpa [#allocation6], 1
    %152 = vsyncpa [#allocation4], 1

</llo_original>
